<compile_context>
chip_gen: v7x
topology: tpu7x:2x2x1
jax: 0.10.0
libtpu: 0.0.40
codegen_flags: <defaults>
</compile_context>

<pallas_src>
import functools

import jax
import jax.numpy as jnp
from jax.experimental import pallas as pl
from jax.experimental.pallas import tpu as pltpu

BN_EPS = 1e-5


def _round_up(x, m):
    return (x + m - 1) // m * m


def _vmem_capacity_bytes():
    """Physical VMEM per core; conservative 64 MiB (v7x-sized) fallback."""
    try:
        info = pltpu.get_tpu_info()
        for name in ("vmem_capacity_bytes", "vmem_size_bytes", "vmem_bytes"):
            cap = getattr(info, name, None)
            if cap is None:
                continue
            cap = int(cap)
            if 8 * 2**20 <= cap <= 2**31:
                return cap
    except Exception:
        pass
    return 64 * 1024 * 1024


def pred_kernel(x_ref, w1_ref, gamma_ref, beta_ref, w2_ref, b2_ref, o_ref,
                scale_ref, shift_ref, h_ref=None, *, inv_n, keep_h):
    # scale_ref / shift_ref double as per-feature sum / sum-of-squares
    # accumulators during pass 0 and hold the folded BN scale / shift during
    # pass 1 (fold computed exactly once, at pass 1 tile 0).
    p = pl.program_id(0)   # 0 = batch-statistics pass, 1 = apply pass
    i = pl.program_id(1)   # batch-tile index

    @pl.when(p == 0)
    def _stats():
        @pl.when(i == 0)
        def _init():
            scale_ref[...] = jnp.zeros_like(scale_ref)
            shift_ref[...] = jnp.zeros_like(shift_ref)

        # ln1 WITHOUT bias: train-mode BN's mean subtraction cancels any
        # per-feature constant exactly, so b1 is a mathematical no-op.
        h = jnp.dot(x_ref[...], w1_ref[...], preferred_element_type=jnp.float32)
        scale_ref[...] += jnp.sum(h, axis=0, keepdims=True)
        shift_ref[...] += jnp.sum(h * h, axis=0, keepdims=True)
        if keep_h:
            h_ref[i] = h   # keep the first-layer activation resident in VMEM

    @pl.when(p == 1)
    def _apply():
        @pl.when(i == 0)
        def _fold_bn_once():
            # Fold BatchNorm1d (train-mode batch stats, biased variance) into
            # one scale/shift FMA.  Padded rows are exact zeros, so dividing
            # by the true N is exact.  NOTE: E[h^2]-E[h]^2 can cancel when
            # |mean| >> std; the clamp bounds it, acceptable for this module.
            mean = scale_ref[...] * inv_n                             # (1, midc)
            var = jnp.maximum(shift_ref[...] * inv_n - mean * mean, 0.0)
            s = gamma_ref[...] * jax.lax.rsqrt(var + BN_EPS)
            scale_ref[...] = s
            shift_ref[...] = beta_ref[...] - mean * s

        if keep_h:
            h = h_ref[i]                                              # no recompute
        else:
            h = jnp.dot(x_ref[...], w1_ref[...],
                        preferred_element_type=jnp.float32)

        a = jnp.maximum(h * scale_ref[...] + shift_ref[...], 0.0)     # BN + ReLU
        out = jnp.dot(a.astype(w2_ref.dtype), w2_ref[...],
                      preferred_element_type=jnp.float32)
        o_ref[...] = out + b2_ref[...]


def pred_forward(x, w1, b1, gamma, beta, w2, b2, *, tile_n=None,
                 matmul_dtype=jnp.bfloat16):
    n, inc = x.shape
    midc = w1.shape[1]
    outc = w2.shape[1]
    del b1  # cancelled exactly by train-mode BatchNorm's mean subtraction

    # Lane-dense padding (multiples of 128 on feature axes).
    inc_p = _round_up(inc, 128)
    midc_p = _round_up(midc, 128)
    outc_p = _round_up(outc, 128)

    mm_bytes = jnp.dtype(matmul_dtype).itemsize
    cap = _vmem_capacity_bytes()
    budget = int(cap * 0.6)
    vmem_limit = int(cap * 0.85)

    # Resident footprint (weights double-buffered by the pipeline even though
    # their index_map is constant; BN params / b2 / stats scratch).
    resident = 2 * (inc_p * midc_p + midc_p * outc_p) * mm_bytes
    resident += 2 * (2 * midc_p + outc_p) * 4 + 2 * midc_p * 4

    # Per-batch-row cost: double-buffered x tile + f32 out tile + ~4 full-width
    # f32 intermediates in the apply pass (h, FMA result, a, Mosaic temps).
    per_row = 2 * inc_p * mm_bytes + 2 * outc_p * 4 + 4 * midc_p * 4

    if tile_n is None:
        avail = max(budget - resident, per_row * 8)
        tile_n = max(8, min(1024, avail // per_row, _round_up(n, 8)))
        tile_n = int(tile_n) // 8 * 8
    n_pad = _round_up(n, tile_n)
    nt = n_pad // tile_n

    # Keep h resident when it fits: skips the pass-1 x re-stream and the
    # first-matmul recompute.
    h_bytes = n_pad * midc_p * 4
    keep_h = h_bytes <= max(0, budget - resident - tile_n * per_row)

    f32 = jnp.float32
    # Pad with zeros FIRST (padded rows stay exactly 0), then cast once in the
    # wrapper so the kernel never re-casts resident operands.
    xp = jnp.pad(x.astype(f32), ((0, n_pad - n), (0, inc_p - inc))).astype(matmul_dtype)
    w1p = jnp.pad(w1.astype(f32), ((0, inc_p - inc), (0, midc_p - midc))).astype(matmul_dtype)
    w2p = jnp.pad(w2.astype(f32), ((0, midc_p - midc), (0, outc_p - outc))).astype(matmul_dtype)
    gp = jnp.pad(gamma.astype(f32), (0, midc_p - midc)).reshape(1, midc_p)
    bp = jnp.pad(beta.astype(f32), (0, midc_p - midc)).reshape(1, midc_p)
    b2p = jnp.pad(b2.astype(f32), (0, outc_p - outc)).reshape(1, outc_p)

    kernel = functools.partial(pred_kernel, inv_n=1.0 / n, keep_h=keep_h)

    if keep_h:
        # Pass 1 does not need x: pin its block to (0,0) so it is not
        # re-streamed from HBM during the apply pass.
        x_map = lambda p, i: (i * (1 - p), 0)
    else:
        x_map = lambda p, i: (i, 0)

    scratch = [pltpu.VMEM((1, midc_p), jnp.float32),   # sum  -> BN scale
               pltpu.VMEM((1, midc_p), jnp.float32)]   # sumsq -> BN shift
    if keep_h:
        scratch.append(pltpu.VMEM((nt, tile_n, midc_p), jnp.float32))

    mm1 = 2 * n_pad * inc_p * midc_p
    mm2 = 2 * n_pad * midc_p * outc_p
    flops = (mm1 + mm2) if keep_h else (2 * mm1 + mm2)
    x_stream_bytes = n_pad * inc_p * mm_bytes * (1 if keep_h else 2)
    bytes_accessed = (x_stream_bytes
                      + (inc_p * midc_p + midc_p * outc_p) * mm_bytes
                      + 4 * n_pad * outc_p)

    out_padded = pl.pallas_call(
        kernel,
        out_shape=jax.ShapeDtypeStruct((n_pad, outc_p), jnp.float32),
        grid=(2, nt),
        in_specs=[
            pl.BlockSpec((tile_n, inc_p), x_map),                  # x tile
            pl.BlockSpec((inc_p, midc_p), lambda p, i: (0, 0)),    # W1 (resident)
            pl.BlockSpec((1, midc_p), lambda p, i: (0, 0)),        # gamma
            pl.BlockSpec((1, midc_p), lambda p, i: (0, 0)),        # beta
            pl.BlockSpec((midc_p, outc_p), lambda p, i: (0, 0)),   # W2 (resident)
            pl.BlockSpec((1, outc_p), lambda p, i: (0, 0)),        # b2
        ],
        # (i*p, 0): block (0,0) during the stats pass (no spurious writebacks),
        # per-tile blocks during the apply pass.
        out_specs=pl.BlockSpec((tile_n, outc_p), lambda p, i: (i * p, 0)),
        scratch_shapes=scratch,
        compiler_params=pltpu.CompilerParams(
            # Both axes sequential: pass 1 needs statistics accumulated over
            # every batch tile of pass 0 (scratch is per-core).
            dimension_semantics=("arbitrary", "arbitrary"),
            vmem_limit_bytes=vmem_limit),
        cost_estimate=pl.CostEstimate(
            flops=int(flops),
            transcendentals=int(midc_p),        # one rsqrt per feature, once
            bytes_accessed=int(bytes_accessed)),
    )(xp, w1p, gp, bp, w2p, b2p)

    return out_padded[:n, :outc]


def init_params(key, inc, midc, outc):
    """Deterministic PyTorch-style Linear init (uniform +-1/sqrt(fan_in))."""
    k1, k2, k3, k4 = jax.random.split(key, 4)
    lim1 = 1.0 / jnp.sqrt(inc)
    lim2 = 1.0 / jnp.sqrt(midc)
    w1 = jax.random.uniform(k1, (inc, midc), jnp.float32, -lim1, lim1)
    b1 = jax.random.uniform(k2, (midc,), jnp.float32, -lim1, lim1)
    gamma = jnp.ones((midc,), jnp.float32)   # BatchNorm1d weight
    beta = jnp.zeros((midc,), jnp.float32)   # BatchNorm1d bias
    w2 = jax.random.uniform(k3, (midc, outc), jnp.float32, -lim2, lim2)
    b2 = jax.random.uniform(k4, (outc,), jnp.float32, -lim2, lim2)
    return w1, b1, gamma, beta, w2, b2


def pred_reference(x, w1, b1, gamma, beta, w2, b2):
    """Plain-JAX reference of the PyTorch module (train-mode BN, biased var)."""
    h = x @ w1 + b1
    mean = jnp.mean(h, axis=0, keepdims=True)
    var = jnp.mean((h - mean) ** 2, axis=0, keepdims=True)
    h = (h - mean) / jnp.sqrt(var + BN_EPS) * gamma + beta
    h = jnp.maximum(h, 0.0)
    return h @ w2 + b2


if __name__ == "__main__":
    # Small shapes consistent with Pred(inc, midc, outc) on a (batch, inc) input.
    N, INC, MIDC, OUTC = 8, 32, 64, 32

    key = jax.random.PRNGKey(0)
    kx, kp = jax.random.split(key)
    x = jax.random.normal(kx, (N, INC), jnp.float32)
    params = init_params(kp, INC, MIDC, OUTC)

    ref = pred_reference(x, *params)

    # Default fast path: bf16 MXU operands, f32 accumulation everywhere else.
    out_bf16 = jax.block_until_ready(pred_forward(x, *params))
    assert out_bf16.shape == (N, OUTC)
    assert jnp.allclose(out_bf16, ref, atol=3e-2, rtol=3e-2), "bf16 path mismatch"

    # Full-f32 path (accuracy fallback, e.g. for v5e-sensitive workloads).
    out_f32 = jax.block_until_ready(
        pred_forward(x, *params, matmul_dtype=jnp.float32))
    assert jnp.allclose(out_f32, ref, atol=1e-3, rtol=1e-3), "f32 path mismatch"

    print("KERNEL_OK")
</pallas_src>

<mosaic_0001>
module attributes {stable_mosaic.version = 11 : i64} {
  func.func @pred_kernel(%arg0: i32, %arg1: i32, %arg2: memref<8x128xbf16, #tpu.memory_space<vmem>>, %arg3: memref<128x128xbf16, #tpu.memory_space<vmem>>, %arg4: memref<1x128xf32, #tpu.memory_space<vmem>>, %arg5: memref<1x128xf32, #tpu.memory_space<vmem>>, %arg6: memref<128x128xbf16, #tpu.memory_space<vmem>>, %arg7: memref<1x128xf32, #tpu.memory_space<vmem>>, %arg8: memref<8x128xf32, #tpu.memory_space<vmem>>, %arg9: memref<1x128xf32, #tpu.memory_space<vmem>>, %arg10: memref<1x128xf32, #tpu.memory_space<vmem>>, %arg11: memref<1x8x128xf32, #tpu.memory_space<vmem>>) attributes {dimension_semantics = [#tpu.dimension_semantics<arbitrary>, #tpu.dimension_semantics<arbitrary>], iteration_bounds = array<i64: 2, 1>, scalar_prefetch = 0 : i64, scratch_operands = 3 : i64, tpu.core_type = #tpu.core_type<tc>, window_params = [{transform_indices = @transform_0, window_bounds = array<i64: 8, 128>}, {pipeline_mode = #tpu.pipeline_mode<synchronous>, transform_indices = @transform_1, window_bounds = array<i64: 128, 128>}, {pipeline_mode = #tpu.pipeline_mode<synchronous>, transform_indices = @transform_2, window_bounds = array<i64: 1, 128>}, {pipeline_mode = #tpu.pipeline_mode<synchronous>, transform_indices = @transform_3, window_bounds = array<i64: 1, 128>}, {pipeline_mode = #tpu.pipeline_mode<synchronous>, transform_indices = @transform_4, window_bounds = array<i64: 128, 128>}, {pipeline_mode = #tpu.pipeline_mode<synchronous>, transform_indices = @transform_5, window_bounds = array<i64: 1, 128>}, {transform_indices = @transform_6, window_bounds = array<i64: 8, 128>}]} {
    %c0_i32 = arith.constant 0 : i32
    %0 = arith.cmpi eq, %arg0, %c0_i32 : i32
    %1 = arith.extui %0 : i1 to i32
    %c0_i32_0 = arith.constant 0 : i32
    %2 = arith.cmpi ne, %1, %c0_i32_0 : i32
    scf.if %2 {
      %c0_i32_2 = arith.constant 0 : i32
      %6 = arith.cmpi eq, %arg1, %c0_i32_2 : i32
      %7 = arith.extui %6 : i1 to i32
      %c0_i32_3 = arith.constant 0 : i32
      %8 = arith.cmpi ne, %7, %c0_i32_3 : i32
      scf.if %8 {
        %cst_19 = arith.constant 0.000000e+00 : f32
        %27 = vector.broadcast %cst_19 : f32 to vector<1x128xf32>
        %c0_20 = arith.constant 0 : index
        %c0_21 = arith.constant 0 : index
        %28 = vector.load %arg9[%c0_20, %c0_21] : memref<1x128xf32, #tpu.memory_space<vmem>>, vector<1x128xf32>
        tpu.vector_store %arg9[%c0_20, %c0_21], %27 {strides = array<i32>} : memref<1x128xf32, #tpu.memory_space<vmem>>, vector<1x128xf32>,
        %cst_22 = arith.constant 0.000000e+00 : f32
        %29 = vector.broadcast %cst_22 : f32 to vector<1x128xf32>
        %c0_23 = arith.constant 0 : index
        %c0_24 = arith.constant 0 : index
        %30 = vector.load %arg10[%c0_23, %c0_24] : memref<1x128xf32, #tpu.memory_space<vmem>>, vector<1x128xf32>
        tpu.vector_store %arg10[%c0_23, %c0_24], %29 {strides = array<i32>} : memref<1x128xf32, #tpu.memory_space<vmem>>, vector<1x128xf32>,
      } else {
      }
      %c0 = arith.constant 0 : index
      %c0_4 = arith.constant 0 : index
      %9 = vector.load %arg2[%c0, %c0_4] : memref<8x128xbf16, #tpu.memory_space<vmem>>, vector<8x128xbf16>
      %c0_5 = arith.constant 0 : index
      %c0_6 = arith.constant 0 : index
      %10 = vector.load %arg3[%c0_5, %c0_6] : memref<128x128xbf16, #tpu.memory_space<vmem>>, vector<128x128xbf16>
      %cst = arith.constant dense<0.000000e+00> : vector<8x128xf32>
      %11 = tpu.matmul %9, %10, %cst {dimension_numbers = #tpu.dot_dimension_numbers<[1], [0], [0], [1], [0, 0, 1, 1], [], []>} : vector<8x128xbf16>, vector<128x128xbf16>, vector<8x128xf32> -> vector<8x128xf32>
      %c0_7 = arith.constant 0 : index
      %c0_8 = arith.constant 0 : index
      %12 = vector.load %arg9[%c0_7, %c0_8] : memref<1x128xf32, #tpu.memory_space<vmem>>, vector<1x128xf32>
      %cst_9 = arith.constant dense<0.000000e+00> : vector<128xf32>
      %13 = vector.multi_reduction <add>, %11, %cst_9 [0] : vector<8x128xf32> to vector<128xf32>
      %14 = vector.shape_cast %13 : vector<128xf32> to vector<1x128xf32>
      %15 = arith.addf %12, %14 : vector<1x128xf32>
      %c0_10 = arith.constant 0 : index
      %c0_11 = arith.constant 0 : index
      %16 = vector.load %arg9[%c0_10, %c0_11] : memref<1x128xf32, #tpu.memory_space<vmem>>, vector<1x128xf32>
      tpu.vector_store %arg9[%c0_10, %c0_11], %15 {strides = array<i32>} : memref<1x128xf32, #tpu.memory_space<vmem>>, vector<1x128xf32>,
      %c0_12 = arith.constant 0 : index
      %c0_13 = arith.constant 0 : index
      %17 = vector.load %arg10[%c0_12, %c0_13] : memref<1x128xf32, #tpu.memory_space<vmem>>, vector<1x128xf32>
      %18 = arith.mulf %11, %11 : vector<8x128xf32>
      %cst_14 = arith.constant dense<0.000000e+00> : vector<128xf32>
      %19 = vector.multi_reduction <add>, %18, %cst_14 [0] : vector<8x128xf32> to vector<128xf32>
      %20 = vector.shape_cast %19 : vector<128xf32> to vector<1x128xf32>
      %21 = arith.addf %17, %20 : vector<1x128xf32>
      %c0_15 = arith.constant 0 : index
      %c0_16 = arith.constant 0 : index
      %22 = vector.load %arg10[%c0_15, %c0_16] : memref<1x128xf32, #tpu.memory_space<vmem>>, vector<1x128xf32>
      tpu.vector_store %arg10[%c0_15, %c0_16], %21 {strides = array<i32>} : memref<1x128xf32, #tpu.memory_space<vmem>>, vector<1x128xf32>,
      %23 = arith.index_cast %arg1 : i32 to index
      %c0_17 = arith.constant 0 : index
      %c0_18 = arith.constant 0 : index
      %24 = vector.load %arg11[%23, %c0_17, %c0_18] : memref<1x8x128xf32, #tpu.memory_space<vmem>>, vector<1x8x128xf32>
      %25 = vector.shape_cast %24 : vector<1x8x128xf32> to vector<8x128xf32>
      %26 = vector.shape_cast %11 : vector<8x128xf32> to vector<1x8x128xf32>
      tpu.vector_store %arg11[%23, %c0_17, %c0_18], %26 {strides = array<i32>} : memref<1x8x128xf32, #tpu.memory_space<vmem>>, vector<1x8x128xf32>,
    } else {
    }
    %c1_i32 = arith.constant 1 : i32
    %3 = arith.cmpi eq, %arg0, %c1_i32 : i32
    %4 = arith.extui %3 : i1 to i32
    %c0_i32_1 = arith.constant 0 : i32
    %5 = arith.cmpi ne, %4, %c0_i32_1 : i32
    scf.if %5 {
      %c0_i32_2 = arith.constant 0 : i32
      %6 = arith.cmpi eq, %arg1, %c0_i32_2 : i32
      %7 = arith.extui %6 : i1 to i32
      %c0_i32_3 = arith.constant 0 : i32
      %8 = arith.cmpi ne, %7, %c0_i32_3 : i32
      scf.if %8 {
        %c0_16 = arith.constant 0 : index
        %c0_17 = arith.constant 0 : index
        %27 = vector.load %arg9[%c0_16, %c0_17] : memref<1x128xf32, #tpu.memory_space<vmem>>, vector<1x128xf32>
        %cst_18 = arith.constant 1.250000e-01 : f32
        %28 = vector.broadcast %cst_18 : f32 to vector<1x128xf32>
        %29 = arith.mulf %27, %28 : vector<1x128xf32>
        %c0_19 = arith.constant 0 : index
        %c0_20 = arith.constant 0 : index
        %30 = vector.load %arg10[%c0_19, %c0_20] : memref<1x128xf32, #tpu.memory_space<vmem>>, vector<1x128xf32>
        %cst_21 = arith.constant 1.250000e-01 : f32
        %31 = vector.broadcast %cst_21 : f32 to vector<1x128xf32>
        %32 = arith.mulf %30, %31 : vector<1x128xf32>
        %33 = arith.mulf %29, %29 : vector<1x128xf32>
        %34 = arith.subf %32, %33 : vector<1x128xf32>
        %cst_22 = arith.constant 0.000000e+00 : f32
        %35 = vector.broadcast %cst_22 : f32 to vector<1x128xf32>
        %36 = arith.maximumf %34, %35 : vector<1x128xf32>
        %c0_23 = arith.constant 0 : index
        %c0_24 = arith.constant 0 : index
        %37 = vector.load %arg4[%c0_23, %c0_24] : memref<1x128xf32, #tpu.memory_space<vmem>>, vector<1x128xf32>
        %cst_25 = arith.constant 9.99999974E-6 : f32
        %38 = vector.broadcast %cst_25 : f32 to vector<1x128xf32>
        %39 = arith.addf %36, %38 : vector<1x128xf32>
        %40 = math.rsqrt %39 : vector<1x128xf32>
        %41 = arith.mulf %37, %40 : vector<1x128xf32>
        %c0_26 = arith.constant 0 : index
        %c0_27 = arith.constant 0 : index
        %42 = vector.load %arg9[%c0_26, %c0_27] : memref<1x128xf32, #tpu.memory_space<vmem>>, vector<1x128xf32>
        tpu.vector_store %arg9[%c0_26, %c0_27], %41 {strides = array<i32>} : memref<1x128xf32, #tpu.memory_space<vmem>>, vector<1x128xf32>,
        %c0_28 = arith.constant 0 : index
        %c0_29 = arith.constant 0 : index
        %43 = vector.load %arg5[%c0_28, %c0_29] : memref<1x128xf32, #tpu.memory_space<vmem>>, vector<1x128xf32>
        %44 = arith.mulf %29, %41 : vector<1x128xf32>
        %45 = arith.subf %43, %44 : vector<1x128xf32>
        %c0_30 = arith.constant 0 : index
        %c0_31 = arith.constant 0 : index
        %46 = vector.load %arg10[%c0_30, %c0_31] : memref<1x128xf32, #tpu.memory_space<vmem>>, vector<1x128xf32>
        tpu.vector_store %arg10[%c0_30, %c0_31], %45 {strides = array<i32>} : memref<1x128xf32, #tpu.memory_space<vmem>>, vector<1x128xf32>,
      } else {
      }
      %9 = arith.index_cast %arg1 : i32 to index
      %c0 = arith.constant 0 : index
      %c0_4 = arith.constant 0 : index
      %10 = vector.load %arg11[%9, %c0, %c0_4] : memref<1x8x128xf32, #tpu.memory_space<vmem>>, vector<1x8x128xf32>
      %11 = vector.shape_cast %10 : vector<1x8x128xf32> to vector<8x128xf32>
      %c0_5 = arith.constant 0 : index
      %c0_6 = arith.constant 0 : index
      %12 = vector.load %arg9[%c0_5, %c0_6] : memref<1x128xf32, #tpu.memory_space<vmem>>, vector<1x128xf32>
      %13 = vector.broadcast %12 : vector<1x128xf32> to vector<8x128xf32>
      %14 = arith.mulf %11, %13 : vector<8x128xf32>
      %c0_7 = arith.constant 0 : index
      %c0_8 = arith.constant 0 : index
      %15 = vector.load %arg10[%c0_7, %c0_8] : memref<1x128xf32, #tpu.memory_space<vmem>>, vector<1x128xf32>
      %16 = vector.broadcast %15 : vector<1x128xf32> to vector<8x128xf32>
      %17 = arith.addf %14, %16 : vector<8x128xf32>
      %cst = arith.constant 0.000000e+00 : f32
      %18 = vector.broadcast %cst : f32 to vector<8x128xf32>
      %19 = arith.maximumf %17, %18 : vector<8x128xf32>
      %20 = arith.truncf %19 : vector<8x128xf32> to vector<8x128xbf16>
      %c0_9 = arith.constant 0 : index
      %c0_10 = arith.constant 0 : index
      %21 = vector.load %arg6[%c0_9, %c0_10] : memref<128x128xbf16, #tpu.memory_space<vmem>>, vector<128x128xbf16>
      %cst_11 = arith.constant dense<0.000000e+00> : vector<8x128xf32>
      %22 = tpu.matmul %20, %21, %cst_11 {dimension_numbers = #tpu.dot_dimension_numbers<[1], [0], [0], [1], [0, 0, 1, 1], [], []>} : vector<8x128xbf16>, vector<128x128xbf16>, vector<8x128xf32> -> vector<8x128xf32>
      %c0_12 = arith.constant 0 : index
      %c0_13 = arith.constant 0 : index
      %23 = vector.load %arg7[%c0_12, %c0_13] : memref<1x128xf32, #tpu.memory_space<vmem>>, vector<1x128xf32>
      %24 = vector.broadcast %23 : vector<1x128xf32> to vector<8x128xf32>
      %25 = arith.addf %22, %24 : vector<8x128xf32>
      %c0_14 = arith.constant 0 : index
      %c0_15 = arith.constant 0 : index
      %26 = vector.load %arg8[%c0_14, %c0_15] : memref<8x128xf32, #tpu.memory_space<vmem>>, vector<8x128xf32>
      tpu.vector_store %arg8[%c0_14, %c0_15], %25 {strides = array<i32>} : memref<8x128xf32, #tpu.memory_space<vmem>>, vector<8x128xf32>,
    } else {
    }
    return
  }
  func.func @transform_0(%arg0: i32, %arg1: i32) -> (i32, i32) {
    %c1_i32 = arith.constant 1 : i32
    %0 = arith.subi %c1_i32, %arg0 : i32
    %1 = arith.muli %arg1, %0 : i32
    %c0_i32 = arith.constant 0 : i32
    %c0_i32_0 = arith.constant 0 : i32
    return %1, %c0_i32 : i32, i32
  }
  func.func @transform_1(%arg0: i32, %arg1: i32) -> (i32, i32) {
    %c0_i32 = arith.constant 0 : i32
    %c0_i32_0 = arith.constant 0 : i32
    %c0_i32_1 = arith.constant 0 : i32
    return %c0_i32, %c0_i32_0 : i32, i32
  }
  func.func @transform_2(%arg0: i32, %arg1: i32) -> (i32, i32) {
    %c0_i32 = arith.constant 0 : i32
    %c0_i32_0 = arith.constant 0 : i32
    %c0_i32_1 = arith.constant 0 : i32
    return %c0_i32, %c0_i32_0 : i32, i32
  }
  func.func @transform_3(%arg0: i32, %arg1: i32) -> (i32, i32) {
    %c0_i32 = arith.constant 0 : i32
    %c0_i32_0 = arith.constant 0 : i32
    %c0_i32_1 = arith.constant 0 : i32
    return %c0_i32, %c0_i32_0 : i32, i32
  }
  func.func @transform_4(%arg0: i32, %arg1: i32) -> (i32, i32) {
    %c0_i32 = arith.constant 0 : i32
    %c0_i32_0 = arith.constant 0 : i32
    %c0_i32_1 = arith.constant 0 : i32
    return %c0_i32, %c0_i32_0 : i32, i32
  }
  func.func @transform_5(%arg0: i32, %arg1: i32) -> (i32, i32) {
    %c0_i32 = arith.constant 0 : i32
    %c0_i32_0 = arith.constant 0 : i32
    %c0_i32_1 = arith.constant 0 : i32
    return %c0_i32, %c0_i32_0 : i32, i32
  }
  func.func @transform_6(%arg0: i32, %arg1: i32) -> (i32, i32) {
    %0 = arith.muli %arg1, %arg0 : i32
    %c0_i32 = arith.constant 0 : i32
    %c0_i32_0 = arith.constant 0 : i32
    return %0, %c0_i32 : i32, i32
  }
}

</mosaic_0001>

<llo_original>
// kernel: tpu_custom_call.1
$region0: #{tpu_custom_call.1}
  #allocation0 [shape = 'u32[]', space=smem, size = 0x4, offset = 0x4, fixed_abs, tag = 'smem constant byte address 0x4 - core index']
  #allocation1 [shape = 'u32[144,128]{1,0:T(1,128)}', space=vmem, size = 0x12000, scoped, tag = 'internal scratch']
  #allocation2 [shape = 'f32[1,128]{1,0:T(1,128)}', space=vmem, size = 0x200, scoped, tag = 'scratch operand']
  #allocation3 [shape = 'f32[1,128]{1,0:T(1,128)}', space=vmem, size = 0x200, scoped, tag = 'scratch operand']
  #allocation4 [shape = 'f32[1,8,128]{2,1,0:T(8,128)}', space=vmem, size = 0x1000, scoped, tag = 'scratch operand']
  %s0 = inlined_call_operand.hbm [shape: bf16[8,128], index: 0, kind: input, shape index: {}]
  %s1 = inlined_call_operand.hbm [shape: bf16[128,128], index: 1, kind: input, shape index: {}]
  %s2 = inlined_call_operand.vmem [shape: f32[1,128], index: 2, kind: input, shape index: {}]
  %s3 = inlined_call_operand.vmem [shape: f32[1,128], index: 3, kind: input, shape index: {}]
  %s4 = inlined_call_operand.hbm [shape: bf16[128,128], index: 4, kind: input, shape index: {}]
  %s5 = inlined_call_operand.vmem [shape: f32[1,128], index: 5, kind: input, shape index: {}]
  %s6 = inlined_call_operand.hbm [shape: f32[8,128], index: 6, kind: output, shape index: {}]
  %s7 = sld [smem:[#allocation0]]
  $region85: #{tpu_custom_call.1} parent=0
    _
  %s9 = ssub.s32 1, %s7
  %s10 = scalar_select 0, %s9, %s7
  $region1: #{tpu_custom_call.1} parent=0
    #allocation5 [shape = 'u8[4096]{0}', space=vmem, size = 0x1000, scoped, tag = 'input window, operand 0']
    #allocation6 [shape = 's32[2]{0}', space=sflag, size = 0x8, scoped, tag = 'scoped memory for tpu_custom_call.1']
    #allocation7 [shape = 's32[2]{0}', space=sflag, size = 0x8, scoped, tag = 'scoped memory for tpu_custom_call.1']
    #allocation8 [shape = 'u8[32768]{0}', space=vmem, size = 0x8000, scoped, tag = 'input window, operand 1, single buffered']
    #allocation9 [shape = 's32[1]{0}', space=sflag, size = 0x4, scoped, tag = 'scoped memory for tpu_custom_call.1']
    #allocation10 [shape = 'u8[32768]{0}', space=vmem, size = 0x8000, scoped, tag = 'input window, operand 4, single buffered']
    #allocation11 [shape = 'u8[8192]{0}', space=vmem, size = 0x2000, scoped, tag = 'output window, operand 0']
    %11 = vsyncpa [#allocation6], 0
    %s12 = scalar_lea.sflag [#allocation6], 1
    %13 = vsyncpa %s12, 0
    %14 = vsyncpa [#allocation9], 0
    %15 = vsyncpa [#allocation7], 0
    %s16 = scalar_lea.sflag [#allocation7], 1
    %17 = vsyncpa %s16, 0
    loop: start=0, step=1, limit=4
    $region2: #{tpu_custom_call.1} parent=1 // loop_pre_header
      _
    $region3: #{tpu_custom_call.1} parent=1 // loop_header
      %s19 = sphi 0, %s23
      %p20 = scmp.ge.s32.totalorder %s19, 4
      %s26 = sphi 0, %s38
      %s27 = sphi 0, %s34
      %s28 = sphi 0, %s26
      %s29 = sphi 0, %s27
      %s30 = sphi 0, %s28
      %s31 = sphi 0, %s29
      %s45 = sphi 0, %s47
      %s48 = sphi 0, %s45
      %s49 = sphi 0, %s48
      %s65 = sphi 0, %s49
      %s69 = sphi 0, %s69
      %s71 = sphi 0, %s69
      %s72 = sphi 0, %s71
      %s86 = sphi 0, %s72
      %s90 = sphi 0, %s90
      %s92 = sphi 0, %s90
      %s93 = sphi 0, %s92
      %s107 = sphi 0, %s93
      %s111 = sphi 0, %s111
      %s113 = sphi 0, %s111
      %s114 = sphi 0, %s113
      %s128 = sphi 0, %s114
      %s132 = sphi 0, %s132
      %s134 = sphi 0, %s132
      %s135 = sphi 0, %s134
      %s149 = sphi 0, %s135
      %s153 = sphi 0, %s153
      %s155 = sphi 0, %s153
      %s156 = sphi 0, %s155
      %s170 = sphi 0, %s156
      %s178 = sphi 0, %s180
      %s181 = sphi 0, %s178
      %s182 = sphi 0, %s181
      %s198 = sphi 0, %s182
    $region4: #{tpu_custom_call.1} parent=1 // loop_header_branch
      %22 = sbr.rel (%p20) target = $region8
    $region5: #{tpu_custom_call.1} parent=1 // loop_body
      %s24 = ssub.s32 %s19, 1
      %s25 = ssub.s32 %s19, 2
      %s32 = sadd.s32 1, %s27
      %p33 = scmp.ge.s32.totalorder %s32, 1
      %s34 = scalar_select %p33, 0, %s32
      %s35 = sadd.s32 1, %s26
      %s36 = scalar_select %p33, %s35, %s26
      %p37 = scmp.ge.s32.totalorder %s36, 2
      %s38 = scalar_select %p37, 0, %s36
      %s39 = ssub.s32 1, %s26
      %s40 = smul.u32 %s27, %s39
      %s41 = ssub.s32 1, %s38
      %s42 = smul.u32 %s34, %s41
      %s43 = ssub.s32 %s40, %s42
      %p44 = scmp.eq.s32.totalorder %s43, 0
      %s46 = sadd.s32 %s45, 1
      %s47 = scalar_select %p44, %s45, %s46
      %p50 = pneg %p44
      %p51 = scmp.eq.s32.totalorder %s19, 1
      %p52 = por %p50, %p51
      %p53 = scmp.ne.s32.totalorder %s45, %s48
      %p54 = scmp.eq.s32.totalorder %s19, 0
      %p55 = por %p53, %p54
      %p56 = scmp.ne.s32.totalorder %s45, %s48
      %p57 = scmp.eq.s32.totalorder %s24, 1
      %p58 = por %p56, %p57
      %p59 = scmp.ne.s32.totalorder %s48, %s49
      %p60 = scmp.eq.s32.totalorder %s24, 0
      %p61 = por %p59, %p60
      %p62 = scmp.ne.s32.totalorder %s48, %s49
      %p63 = scmp.eq.s32.totalorder %s25, 1
      %p64 = por %p62, %p63
      %p66 = scmp.ne.s32.totalorder %s49, %s65
      %p67 = scmp.eq.s32.totalorder %s25, 0
      %p68 = por %p66, %p67
      %s70 = sadd.s32 %s69, 1
      %p73 = scmp.eq.s32.totalorder %s19, 1
      %p74 = scmp.ne.s32.totalorder %s69, %s71
      %p75 = scmp.eq.s32.totalorder %s19, 0
      %p76 = por %p74, %p75
      %p77 = scmp.ne.s32.totalorder %s69, %s71
      %p78 = scmp.eq.s32.totalorder %s24, 1
      %p79 = por %p77, %p78
      %p80 = scmp.ne.s32.totalorder %s71, %s72
      %p81 = scmp.eq.s32.totalorder %s24, 0
      %p82 = por %p80, %p81
      %p83 = scmp.ne.s32.totalorder %s71, %s72
      %p84 = scmp.eq.s32.totalorder %s25, 1
      %p85 = por %p83, %p84
      %p87 = scmp.ne.s32.totalorder %s72, %s86
      %p88 = scmp.eq.s32.totalorder %s25, 0
      %p89 = por %p87, %p88
      %s91 = sadd.s32 %s90, 1
      %p94 = scmp.eq.s32.totalorder %s19, 1
      %p95 = scmp.ne.s32.totalorder %s90, %s92
      %p96 = scmp.eq.s32.totalorder %s19, 0
      %p97 = por %p95, %p96
      %p98 = scmp.ne.s32.totalorder %s90, %s92
      %p99 = scmp.eq.s32.totalorder %s24, 1
      %p100 = por %p98, %p99
      %p101 = scmp.ne.s32.totalorder %s92, %s93
      %p102 = scmp.eq.s32.totalorder %s24, 0
      %p103 = por %p101, %p102
      %p104 = scmp.ne.s32.totalorder %s92, %s93
      %p105 = scmp.eq.s32.totalorder %s25, 1
      %p106 = por %p104, %p105
      %p108 = scmp.ne.s32.totalorder %s93, %s107
      %p109 = scmp.eq.s32.totalorder %s25, 0
      %p110 = por %p108, %p109
      %s112 = sadd.s32 %s111, 1
      %p115 = scmp.eq.s32.totalorder %s19, 1
      %p116 = scmp.ne.s32.totalorder %s111, %s113
      %p117 = scmp.eq.s32.totalorder %s19, 0
      %p118 = por %p116, %p117
      %p119 = scmp.ne.s32.totalorder %s111, %s113
      %p120 = scmp.eq.s32.totalorder %s24, 1
      %p121 = por %p119, %p120
      %p122 = scmp.ne.s32.totalorder %s113, %s114
      %p123 = scmp.eq.s32.totalorder %s24, 0
      %p124 = por %p122, %p123
      %p125 = scmp.ne.s32.totalorder %s113, %s114
      %p126 = scmp.eq.s32.totalorder %s25, 1
      %p127 = por %p125, %p126
      %p129 = scmp.ne.s32.totalorder %s114, %s128
      %p130 = scmp.eq.s32.totalorder %s25, 0
      %p131 = por %p129, %p130
      %s133 = sadd.s32 %s132, 1
      %p136 = scmp.eq.s32.totalorder %s19, 1
      %p137 = scmp.ne.s32.totalorder %s132, %s134
      %p138 = scmp.eq.s32.totalorder %s19, 0
      %p139 = por %p137, %p138
      %p140 = scmp.ne.s32.totalorder %s132, %s134
      %p141 = scmp.eq.s32.totalorder %s24, 1
      %p142 = por %p140, %p141
      %p143 = scmp.ne.s32.totalorder %s134, %s135
      %p144 = scmp.eq.s32.totalorder %s24, 0
      %p145 = por %p143, %p144
      %p146 = scmp.ne.s32.totalorder %s134, %s135
      %p147 = scmp.eq.s32.totalorder %s25, 1
      %p148 = por %p146, %p147
      %p150 = scmp.ne.s32.totalorder %s135, %s149
      %p151 = scmp.eq.s32.totalorder %s25, 0
      %p152 = por %p150, %p151
      %s154 = sadd.s32 %s153, 1
      %p157 = scmp.eq.s32.totalorder %s19, 1
      %p158 = scmp.ne.s32.totalorder %s153, %s155
      %p159 = scmp.eq.s32.totalorder %s19, 0
      %p160 = por %p158, %p159
      %p161 = scmp.ne.s32.totalorder %s153, %s155
      %p162 = scmp.eq.s32.totalorder %s24, 1
      %p163 = por %p161, %p162
      %p164 = scmp.ne.s32.totalorder %s155, %s156
      %p165 = scmp.eq.s32.totalorder %s24, 0
      %p166 = por %p164, %p165
      %p167 = scmp.ne.s32.totalorder %s155, %s156
      %p168 = scmp.eq.s32.totalorder %s25, 1
      %p169 = por %p167, %p168
      %p171 = scmp.ne.s32.totalorder %s156, %s170
      %p172 = scmp.eq.s32.totalorder %s25, 0
      %p173 = por %p171, %p172
      %s174 = smul.u32 %s27, %s26
      %s175 = smul.u32 %s34, %s38
      %s176 = ssub.s32 %s174, %s175
      %p177 = scmp.eq.s32.totalorder %s176, 0
      %s179 = sadd.s32 %s178, 1
      %s180 = scalar_select %p177, %s178, %s179
      %p183 = pneg %p177
      %p184 = scmp.eq.s32.totalorder %s19, 1
      %p185 = por %p183, %p184
      %p186 = scmp.ne.s32.totalorder %s178, %s181
      %p187 = scmp.eq.s32.totalorder %s19, 0
      %p188 = por %p186, %p187
      %p189 = scmp.ne.s32.totalorder %s178, %s181
      %p190 = scmp.eq.s32.totalorder %s24, 1
      %p191 = por %p189, %p190
      %p192 = scmp.ne.s32.totalorder %s181, %s182
      %p193 = scmp.eq.s32.totalorder %s24, 0
      %p194 = por %p192, %p193
      %p195 = scmp.ne.s32.totalorder %s181, %s182
      %p196 = scmp.eq.s32.totalorder %s25, 1
      %p197 = por %p195, %p196
      %p199 = scmp.ne.s32.totalorder %s182, %s198
      %p200 = scmp.eq.s32.totalorder %s25, 0
      %p201 = por %p199, %p200
      %p202 = scmp.le.s32.totalorder 1, %s19
      %p203 = scmp.lt.s32.totalorder %s19, 3
      %p204 = pnand %p202, %p203
      %p205 = pneg %p204
      // Predicated region
      $region9: #{tpu_custom_call.1} parent=5 // pred_check
        _
      $region10: #{tpu_custom_call.1} parent=5 // pred_check_branch
        %207 = sbr.rel (%p204) target = $region12
      $region11: #{tpu_custom_call.1} parent=5 // pred_region
        %s208 = ssub.s32 %s19, 1
        // Predicated region
        $region13: #{tpu_custom_call.1} parent=11 // pred_check
          %p209 = pneg %p82
        $region14: #{tpu_custom_call.1} parent=11 // pred_check_branch
          %211 = sbr.rel (%p209) target = $region16
        $region15: #{tpu_custom_call.1} parent=11 // pred_region
          %s213 = ssub.s32 1024, 1024
          %214 = vsyncadd [#allocation9], %s213
          %s215 = sshll.u32 [#allocation8], 4
          %s216 = int_to_ptr.vmem [resolvable:$true] %s215
          %221 = dma.hbm_to_vmem [thread:$0]  %s1, 1024, %s216, [#allocation9], 64, 64, 4
        $region16: #{tpu_custom_call.1} parent=11 // pred_fallthru
          _
        // Predicated region
        $region17: #{tpu_custom_call.1} parent=11 // pred_check
          %p222 = pneg %p103
        $region18: #{tpu_custom_call.1} parent=11 // pred_check_branch
          %224 = sbr.rel (%p222) target = $region20
        $region19: #{tpu_custom_call.1} parent=11 // pred_region
          _
        $region20: #{tpu_custom_call.1} parent=11 // pred_fallthru
          _
        // Predicated region
        $region21: #{tpu_custom_call.1} parent=11 // pred_check
          %p225 = pneg %p124
        $region22: #{tpu_custom_call.1} parent=11 // pred_check_branch
          %227 = sbr.rel (%p225) target = $region24
        $region23: #{tpu_custom_call.1} parent=11 // pred_region
          _
        $region24: #{tpu_custom_call.1} parent=11 // pred_fallthru
          _
        // Predicated region
        $region25: #{tpu_custom_call.1} parent=11 // pred_check
          %p228 = pneg %p145
        $region26: #{tpu_custom_call.1} parent=11 // pred_check_branch
          %230 = sbr.rel (%p228) target = $region28
        $region27: #{tpu_custom_call.1} parent=11 // pred_region
          %s232 = ssub.s32 1024, 1024
          %233 = vsyncadd [#allocation9], %s232
          %s234 = sshll.u32 [#allocation10], 4
          %s235 = int_to_ptr.vmem [resolvable:$true] %s234
          %240 = dma.hbm_to_vmem [thread:$0]  %s4, 1024, %s235, [#allocation9], 64, 64, 4
        $region28: #{tpu_custom_call.1} parent=11 // pred_fallthru
          _
        // Predicated region
        $region29: #{tpu_custom_call.1} parent=11 // pred_check
          %p241 = pneg %p166
        $region30: #{tpu_custom_call.1} parent=11 // pred_check_branch
          %243 = sbr.rel (%p241) target = $region32
        $region31: #{tpu_custom_call.1} parent=11 // pred_region
          _
        $region32: #{tpu_custom_call.1} parent=11 // pred_fallthru
          _
      $region12: #{tpu_custom_call.1} parent=5 // pred_fallthru
        _
      %p244 = scmp.lt.s32.totalorder %s19, 2
      // Predicated region
      $region33: #{tpu_custom_call.1} parent=5 // pred_check
        %p245 = pneg %p244
      $region34: #{tpu_custom_call.1} parent=5 // pred_check_branch
        %247 = sbr.rel (%p245) target = $region36
      $region35: #{tpu_custom_call.1} parent=5 // pred_region
        // Predicated region
        $region37: #{tpu_custom_call.1} parent=35 // pred_check
          %p248 = pneg %p55
        $region38: #{tpu_custom_call.1} parent=35 // pred_check_branch
          %250 = sbr.rel (%p248) target = $region40
        $region39: #{tpu_custom_call.1} parent=35 // pred_region
          %s251 = sand.u32 %s45, 1
          %s252 = scalar_lea.sflag [#allocation6], %s251
          %s253 = sand.u32 %s45, 1
          %s254 = smul.addr %s253, 4
          %s255 = scalar_lea.vmem [#allocation5], %s254
          %s256 = ssub.s32 1, %s26
          %s257 = smul.u32 %s27, %s256
          %s259 = ssub.s32 64, 64
          %260 = vsyncadd %s252, %s259
          %s261 = smul.addr %s257, 64
          %s262 = scalar_lea.hbm %s0, %s261
          %s264 = sshll.u32 %s255, 4
          %s265 = int_to_ptr.vmem [resolvable:$true] %s264
          %267 = dma.hbm_to_vmem [thread:$0]  %s262, 64, %s265, %s252
        $region40: #{tpu_custom_call.1} parent=35 // pred_fallthru
          _
      $region36: #{tpu_custom_call.1} parent=5 // pred_fallthru
        _
      %p268 = scmp.le.s32.totalorder 1, %s19
      %p269 = scmp.lt.s32.totalorder %s19, 3
      %p270 = pnand %p268, %p269
      %p271 = pneg %p270
      // Predicated region
      $region41: #{tpu_custom_call.1} parent=5 // pred_check
        _
      $region42: #{tpu_custom_call.1} parent=5 // pred_check_branch
        %273 = sbr.rel (%p270) target = $region44
      $region43: #{tpu_custom_call.1} parent=5 // pred_region
        %s274 = ssub.s32 %s19, 1
        %s275 = sand.u32 %s48, 1
        %s276 = scalar_lea.sflag [#allocation6], %s275
        %s277 = sand.u32 %s48, 1
        %s278 = smul.addr %s277, 4
        %s279 = scalar_lea.vmem [#allocation5], %s278
        // Predicated region
        $region45: #{tpu_custom_call.1} parent=43 // pred_check
          %p280 = pneg %p61
        $region46: #{tpu_custom_call.1} parent=43 // pred_check_branch
          %282 = sbr.rel (%p280) target = $region48
        $region47: #{tpu_custom_call.1} parent=43 // pred_region
          %283 = dma.done %s276, 64
        $region48: #{tpu_custom_call.1} parent=43 // pred_fallthru
          _
        // Predicated region
        $region49: #{tpu_custom_call.1} parent=43 // pred_check
          %p284 = pneg %p82
        $region50: #{tpu_custom_call.1} parent=43 // pred_check_branch
          %286 = sbr.rel (%p284) target = $region52
        $region51: #{tpu_custom_call.1} parent=43 // pred_region
          %287 = dma.done [#allocation9], 1024
        $region52: #{tpu_custom_call.1} parent=43 // pred_fallthru
          _
        // Predicated region
        $region53: #{tpu_custom_call.1} parent=43 // pred_check
          %p288 = pneg %p145
        $region54: #{tpu_custom_call.1} parent=43 // pred_check_branch
          %290 = sbr.rel (%p288) target = $region56
        $region55: #{tpu_custom_call.1} parent=43 // pred_region
          %291 = dma.done [#allocation9], 1024
        $region56: #{tpu_custom_call.1} parent=43 // pred_fallthru
          _
        %s292 = sand.u32 %s48, 1
        %s293 = scalar_lea.sflag [#allocation6], %s292
        %s294 = sand.u32 %s48, 1
        %s295 = smul.addr %s294, 4
        %s296 = scalar_lea.vmem [#allocation5], %s295
        %p297 = pneg %p61
        %p298 = pneg %p58
        %p299 = pneg %p82
        %p300 = pneg %p79
        %p301 = pneg %p103
        %p302 = pneg %p100
        %p303 = pneg %p124
        %p304 = pneg %p121
        %p305 = pneg %p145
        %p306 = pneg %p142
        %p307 = pneg %p166
        %p308 = pneg %p163
        %p309 = pneg %p194
        %p310 = pneg %p191
        %s311 = sand.u32 %s181, 1
        %s312 = scalar_lea.sflag [#allocation7], %s311
        %s313 = sand.u32 %s181, 1
        %s314 = smul.addr %s313, 8
        %s315 = scalar_lea.vmem [#allocation11], %s314
        %s316 = ssub.s32 1, %s28
        %s317 = smul.u32 %s29, %s316
        %s318 = smul.u32 %s29, %s28
        %p320 = scmp.eq.s32.totalorder %s28, 0
        // Predicated region
        $region57: #{tpu_custom_call.1} parent=43 // pred_check
          %p321 = pneg %p320
        $region58: #{tpu_custom_call.1} parent=43 // pred_check_branch
          %323 = sbr.rel (%p321) target = $region60
        $region59: #{tpu_custom_call.1} parent=43 // pred_region
          %p324 = scmp.eq.s32.totalorder %s29, 0
          // Predicated region
          $region61: #{tpu_custom_call.1} parent=59 // pred_check
            %p325 = pneg %p324
          $region62: #{tpu_custom_call.1} parent=59 // pred_check_branch
            %327 = sbr.rel (%p325) target = $region64
          $region63: #{tpu_custom_call.1} parent=59 // pred_region
            %328 = vst [vmem:[#allocation2] sm:$0x1] 0.0
            %329 = vst [vmem:[#allocation3] sm:$0x1] 0.0
          $region64: #{tpu_custom_call.1} parent=59 // pred_fallthru
            _
          %v330 = vld [vmem:[%s279] sm:$0xf]
          %v331 = vld [vmem:[#allocation8] sm:$0xf]
          %v332 = vld [vmem:[#allocation8 + $0x4] sm:$0xf]
          %v333 = vld [vmem:[#allocation8 + $0x8] sm:$0xf]
          %v334 = vld [vmem:[#allocation8 + $0xc] sm:$0xf]
          %v335 = vld [vmem:[#allocation8 + $0x10] sm:$0xf]
          %v336 = vld [vmem:[#allocation8 + $0x14] sm:$0xf]
          %v337 = vld [vmem:[#allocation8 + $0x18] sm:$0xf]
          %v338 = vld [vmem:[#allocation8 + $0x1c] sm:$0xf]
          %v339 = vld [vmem:[#allocation8 + $0x20] sm:$0xf]
          %v340 = vld [vmem:[#allocation8 + $0x24] sm:$0xf]
          %v341 = vld [vmem:[#allocation8 + $0x28] sm:$0xf]
          %v342 = vld [vmem:[#allocation8 + $0x2c] sm:$0xf]
          %v343 = vld [vmem:[#allocation8 + $0x30] sm:$0xf]
          %v344 = vld [vmem:[#allocation8 + $0x34] sm:$0xf]
          %v345 = vld [vmem:[#allocation8 + $0x38] sm:$0xf]
          %v346 = vld [vmem:[#allocation8 + $0x3c] sm:$0xf]
          %v363 = vunpack.c.l.b16 %v331
          %v364 = vunpack.c.l.b16 %v332
          %v365 = vunpack.c.l.b16 %v333
          %v366 = vunpack.c.l.b16 %v334
          %v367 = vunpack.c.l.b16 %v335
          %v368 = vunpack.c.l.b16 %v336
          %v369 = vunpack.c.l.b16 %v337
          %v370 = vunpack.c.l.b16 %v338
          %v371 = vunpack.c.l.b16 %v339
          %v372 = vunpack.c.l.b16 %v340
          %v373 = vunpack.c.l.b16 %v341
          %v374 = vunpack.c.l.b16 %v342
          %v375 = vunpack.c.l.b16 %v343
          %v376 = vunpack.c.l.b16 %v344
          %v377 = vunpack.c.l.b16 %v345
          %v378 = vunpack.c.l.b16 %v346
          %v379 = vpack.c.b16 %v364, %v363
          %v380 = vpack.c.b16 %v366, %v365
          %v381 = vpack.c.b16 %v368, %v367
          %v382 = vpack.c.b16 %v370, %v369
          %v383 = vpack.c.b16 %v372, %v371
          %v384 = vpack.c.b16 %v374, %v373
          %v385 = vpack.c.b16 %v376, %v375
          %v386 = vpack.c.b16 %v378, %v377
          %395 = vmatprep.subr.bf16.mxu0 0
          %396 = vmatpush1.bf16.msra.mxu0 %v379
          %397 = vmatprep.subr.bf16.mxu0 0
          %398 = vmatpush1.bf16.msra.mxu0 %v380
          %399 = vmatprep.subr.bf16.mxu0 0
          %400 = vmatpush1.bf16.msra.mxu0 %v381
          %401 = vmatprep.subr.bf16.mxu0 0
          %402 = vmatpush1.bf16.msra.mxu0 %v382
          %403 = vmatprep.subr.bf16.mxu0 0
          %404 = vmatpush1.bf16.msra.mxu0 %v383
          %405 = vmatprep.subr.bf16.mxu0 0
          %406 = vmatpush1.bf16.msra.mxu0 %v384
          %407 = vmatprep.subr.bf16.mxu0 0
          %408 = vmatpush1.bf16.msra.mxu0 %v385
          %409 = vmatprep.subr.bf16.mxu0 0
          %410 = vmatpush1.bf16.msra.mxu0 %v386
          %411 = vmatprep.subr.bf16.mxu0 0
          %412 = vmatpush1.bf16.msra.mxu0 0
          %413 = vmatprep.subr.bf16.mxu0 0
          %414 = vmatpush1.bf16.msra.mxu0 0
          %415 = vmatprep.subr.bf16.mxu0 0
          %416 = vmatpush1.bf16.msra.mxu0 0
          %417 = vmatprep.subr.bf16.mxu0 0
          %418 = vmatpush1.bf16.msra.mxu0 0
          %419 = vmatprep.subr.bf16.mxu0 0
          %420 = vmatpush1.bf16.msra.mxu0 0
          %421 = vmatprep.subr.bf16.mxu0 0
          %422 = vmatpush1.bf16.msra.mxu0 0
          %423 = vmatprep.subr.bf16.mxu0 0
          %424 = vmatpush1.bf16.msra.mxu0 0
          %425 = vmatprep.subr.bf16.mxu0 0
          %426 = vmatpush1.bf16.msra.mxu0 0
          %427 = vmatprep.mubr.bf16.mxu0 0
          %428 = vmatmul.mubr.bf16.gmra.mrb[0].mxu0 %v330
          %v429 = vpop.f32.mrb[0].mxu0
          %v430 = vadd.f32 0.0, %v429
          %v431 = vpop.f32.mrb[0].mxu0
          %v432 = vpop.f32.mrb[0].mxu0
          %v433 = vpop.f32.mrb[0].mxu0
          %434 = vdwg.mxu0
          %v435 = vld [vmem:[#allocation2] sm:$0x1]
          %v436 = vrot.slane %v430, 4
          %v437 = vadd.f32 %v430, %v436
          %v438 = vrot.slane %v437, 2
          %v439 = vadd.f32 %v437, %v438
          %v440 = vrot.slane %v439, 1
          %v441 = vadd.f32 %v439, %v440
          %v442 = vadd.f32 %v435, %v441
          %443 = vst [vmem:[#allocation2] sm:$0x1] %v442
          %v444 = vld [vmem:[#allocation3] sm:$0x1]
          %v445 = vmul.f32 %v430, %v430
          %v446 = vrot.slane %v445, 4
          %v447 = vadd.f32 %v445, %v446
          %v448 = vrot.slane %v447, 2
          %v449 = vadd.f32 %v447, %v448
          %v450 = vrot.slane %v449, 1
          %v451 = vadd.f32 %v449, %v450
          %v452 = vadd.f32 %v444, %v451
          %453 = vst [vmem:[#allocation3] sm:$0x1] %v452
          %s454 = smul.u32 %s29, 8
          %s455 = scalar_lea.vmem [#allocation4], %s454
          %456 = vst [vmem:[%s455] sm:$0xff] %v430
        $region60: #{tpu_custom_call.1} parent=43 // pred_fallthru
          _
        %p457 = scmp.eq.s32.totalorder %s28, 1
        // Predicated region
        $region65: #{tpu_custom_call.1} parent=43 // pred_check
          %p458 = pneg %p457
        $region66: #{tpu_custom_call.1} parent=43 // pred_check_branch
          %460 = sbr.rel (%p458) target = $region68
        $region67: #{tpu_custom_call.1} parent=43 // pred_region
          %p461 = scmp.eq.s32.totalorder %s29, 0
          // Predicated region
          $region69: #{tpu_custom_call.1} parent=67 // pred_check
            %p462 = pneg %p461
          $region70: #{tpu_custom_call.1} parent=67 // pred_check_branch
            %464 = sbr.rel (%p462) target = $region72
          $region71: #{tpu_custom_call.1} parent=67 // pred_region
            %v465 = vld [vmem:[#allocation2] sm:$0x1]
            %v466 = vmul.f32 %v465, 0.125
            %v467 = vld [vmem:[#allocation3] sm:$0x1]
            %v468 = vmul.f32 %v467, 0.125
            %v469 = vmul.f32 %v466, %v466
            %v470 = vsub.f32 %v468, %v469
            %v471 = vmax.f32 %v470, 0.0
            %v472 = vld [vmem:[%s2] sm:$0x1]
            %v473 = vadd.f32 %v471, 1e-05
            %v474 = vrsqrt.pop %v473
            %v475 = vmul.f32 %v472, %v474
            %476 = vst [vmem:[#allocation2] sm:$0x1] %v475
            %v477 = vld [vmem:[%s3] sm:$0x1]
            %v478 = vmul.f32 %v466, %v475
            %v479 = vsub.f32 %v477, %v478
            %480 = vst [vmem:[#allocation3] sm:$0x1] %v479
          $region72: #{tpu_custom_call.1} parent=67 // pred_fallthru
            _
          %s481 = smul.u32 %s29, 8
          %s482 = scalar_lea.vmem [#allocation4], %s481
          %v483 = vld [vmem:[%s482] sm:$0xff]
          %v484 = vld [vmem:[#allocation2] sm:$0x1]
          %v486 = vlaneseq
          %v487 = vshrl.u32 %v486, 7
          %v488 = vsub.s32 0, %v487
          %v489 = vrot.slane %v484, %v488
          %v491 = vmul.f32 %v483, %v489
          %v492 = vld [vmem:[#allocation3] sm:$0x1]
          %v494 = vlaneseq
          %v495 = vshrl.u32 %v494, 7
          %v496 = vsub.s32 0, %v495
          %v497 = vrot.slane %v492, %v496
          %v499 = vadd.f32 %v491, %v497
          %v500 = vmax.f32 %v499, 0.0
          %v501 = vpack.c.bf16 %v500, %v500
          %v502 = vld [vmem:[#allocation10] sm:$0xf]
          %v503 = vld [vmem:[#allocation10 + $0x4] sm:$0xf]
          %v504 = vld [vmem:[#allocation10 + $0x8] sm:$0xf]
          %v505 = vld [vmem:[#allocation10 + $0xc] sm:$0xf]
          %v506 = vld [vmem:[#allocation10 + $0x10] sm:$0xf]
          %v507 = vld [vmem:[#allocation10 + $0x14] sm:$0xf]
          %v508 = vld [vmem:[#allocation10 + $0x18] sm:$0xf]
          %v509 = vld [vmem:[#allocation10 + $0x1c] sm:$0xf]
          %v510 = vld [vmem:[#allocation10 + $0x20] sm:$0xf]
          %v511 = vld [vmem:[#allocation10 + $0x24] sm:$0xf]
          %v512 = vld [vmem:[#allocation10 + $0x28] sm:$0xf]
          %v513 = vld [vmem:[#allocation10 + $0x2c] sm:$0xf]
          %v514 = vld [vmem:[#allocation10 + $0x30] sm:$0xf]
          %v515 = vld [vmem:[#allocation10 + $0x34] sm:$0xf]
          %v516 = vld [vmem:[#allocation10 + $0x38] sm:$0xf]
          %v517 = vld [vmem:[#allocation10 + $0x3c] sm:$0xf]
          %v518 = vld [vmem:[%s5] sm:$0x1]
          %v520 = vlaneseq
          %v521 = vshrl.u32 %v520, 7
          %v522 = vsub.s32 0, %v521
          %v523 = vrot.slane %v518, %v522
          %v541 = vunpack.c.l.b16 %v502
          %v542 = vunpack.c.l.b16 %v503
          %v543 = vunpack.c.l.b16 %v504
          %v544 = vunpack.c.l.b16 %v505
          %v545 = vunpack.c.l.b16 %v506
          %v546 = vunpack.c.l.b16 %v507
          %v547 = vunpack.c.l.b16 %v508
          %v548 = vunpack.c.l.b16 %v509
          %v549 = vunpack.c.l.b16 %v510
          %v550 = vunpack.c.l.b16 %v511
          %v551 = vunpack.c.l.b16 %v512
          %v552 = vunpack.c.l.b16 %v513
          %v553 = vunpack.c.l.b16 %v514
          %v554 = vunpack.c.l.b16 %v515
          %v555 = vunpack.c.l.b16 %v516
          %v556 = vunpack.c.l.b16 %v517
          %v557 = vpack.c.b16 %v542, %v541
          %v558 = vpack.c.b16 %v544, %v543
          %v559 = vpack.c.b16 %v546, %v545
          %v560 = vpack.c.b16 %v548, %v547
          %v561 = vpack.c.b16 %v550, %v549
          %v562 = vpack.c.b16 %v552, %v551
          %v563 = vpack.c.b16 %v554, %v553
          %v564 = vpack.c.b16 %v556, %v555
          %573 = vmatprep.subr.bf16.mxu0 0
          %574 = vmatpush1.bf16.msra.mxu0 %v557
          %575 = vmatprep.subr.bf16.mxu0 0
          %576 = vmatpush1.bf16.msra.mxu0 %v558
          %577 = vmatprep.subr.bf16.mxu0 0
          %578 = vmatpush1.bf16.msra.mxu0 %v559
          %579 = vmatprep.subr.bf16.mxu0 0
          %580 = vmatpush1.bf16.msra.mxu0 %v560
          %581 = vmatprep.subr.bf16.mxu0 0
          %582 = vmatpush1.bf16.msra.mxu0 %v561
          %583 = vmatprep.subr.bf16.mxu0 0
          %584 = vmatpush1.bf16.msra.mxu0 %v562
          %585 = vmatprep.subr.bf16.mxu0 0
          %586 = vmatpush1.bf16.msra.mxu0 %v563
          %587 = vmatprep.subr.bf16.mxu0 0
          %588 = vmatpush1.bf16.msra.mxu0 %v564
          %589 = vmatprep.subr.bf16.mxu0 0
          %590 = vmatpush1.bf16.msra.mxu0 0
          %591 = vmatprep.subr.bf16.mxu0 0
          %592 = vmatpush1.bf16.msra.mxu0 0
          %593 = vmatprep.subr.bf16.mxu0 0
          %594 = vmatpush1.bf16.msra.mxu0 0
          %595 = vmatprep.subr.bf16.mxu0 0
          %596 = vmatpush1.bf16.msra.mxu0 0
          %597 = vmatprep.subr.bf16.mxu0 0
          %598 = vmatpush1.bf16.msra.mxu0 0
          %599 = vmatprep.subr.bf16.mxu0 0
          %600 = vmatpush1.bf16.msra.mxu0 0
          %601 = vmatprep.subr.bf16.mxu0 0
          %602 = vmatpush1.bf16.msra.mxu0 0
          %603 = vmatprep.subr.bf16.mxu0 0
          %604 = vmatpush1.bf16.msra.mxu0 0
          %605 = vmatprep.mubr.bf16.mxu0 0
          %606 = vmatmul.mubr.bf16.gmra.mrb[0].mxu0 %v501
          %v607 = vpop.f32.mrb[0].mxu0
          %v608 = vadd.f32 %v523, %v607
          %v609 = vpop.f32.mrb[0].mxu0
          %v610 = vpop.f32.mrb[0].mxu0
          %v611 = vpop.f32.mrb[0].mxu0
          %612 = vdwg.mxu0
          %613 = vst [vmem:[%s315] sm:$0xff] %v608
        $region68: #{tpu_custom_call.1} parent=43 // pred_fallthru
          _
        %s614 = sand.u32 %s181, 1
        %s615 = scalar_lea.sflag [#allocation7], %s614
        %s616 = sand.u32 %s181, 1
        %s617 = smul.addr %s616, 8
        %s618 = scalar_lea.vmem [#allocation11], %s617
        // Predicated region
        $region73: #{tpu_custom_call.1} parent=43 // pred_check
          %p619 = pneg %p191
        $region74: #{tpu_custom_call.1} parent=43 // pred_check_branch
          %621 = sbr.rel (%p619) target = $region76
        $region75: #{tpu_custom_call.1} parent=43 // pred_region
          %s622 = smul.u32 %s29, %s28
          %s624 = ssub.s32 128, 128
          %625 = vsyncadd %s615, %s624
          %s626 = smul.addr %s622, 128
          %s627 = scalar_lea.hbm %s6, %s626
          %s629 = sshll.u32 %s618, 4
          %s630 = int_to_ptr.vmem [resolvable:$true] %s629
          %632 = dma.vmem_to_hbm [thread:$0]  %s630, 128, %s627, %s615
        $region76: #{tpu_custom_call.1} parent=43 // pred_fallthru
          _
      $region44: #{tpu_custom_call.1} parent=5 // pred_fallthru
        _
      %p633 = scmp.le.s32.totalorder 2, %s19
      // Predicated region
      $region77: #{tpu_custom_call.1} parent=5 // pred_check
        %p634 = pneg %p633
      $region78: #{tpu_custom_call.1} parent=5 // pred_check_branch
        %636 = sbr.rel (%p634) target = $region80
      $region79: #{tpu_custom_call.1} parent=5 // pred_region
        %s637 = ssub.s32 %s19, 2
        // Predicated region
        $region81: #{tpu_custom_call.1} parent=79 // pred_check
          %p638 = pneg %p197
        $region82: #{tpu_custom_call.1} parent=79 // pred_check_branch
          %640 = sbr.rel (%p638) target = $region84
        $region83: #{tpu_custom_call.1} parent=79 // pred_region
          %s641 = sand.u32 %s182, 1
          %s642 = scalar_lea.sflag [#allocation7], %s641
          %s643 = sand.u32 %s182, 1
          %s644 = smul.addr %s643, 8
          %s645 = scalar_lea.vmem [#allocation11], %s644
          %646 = dma.done %s642, 128
        $region84: #{tpu_custom_call.1} parent=79 // pred_fallthru
          _
      $region80: #{tpu_custom_call.1} parent=5 // pred_fallthru
        _
    $region6: #{tpu_custom_call.1} parent=1 // loop_footer
      %s23 = sadd.s32 1, %s19
    $region7: #{tpu_custom_call.1} parent=1 // loop_footer_branch
      %18 = sbr.rel target = $region3
    $region8: #{tpu_custom_call.1} parent=1 // loop_exit
      _
    %647 = vsyncpa [#allocation6], 1
    %s648 = scalar_lea.sflag [#allocation6], 1
    %649 = vsyncpa %s648, 1
    %650 = vsyncpa [#allocation9], 1
    %651 = vsyncpa [#allocation7], 1
    %s652 = scalar_lea.sflag [#allocation7], 1
    %653 = vsyncpa %s652, 1

</llo_original>
